<compile_context>
chip_gen: v7x
topology: tpu7x:2x2x1
jax: 0.10.0
libtpu: 0.0.40
codegen_flags: <defaults>
</compile_context>

<pallas_src>
import numpy as np
import jax
import jax.numpy as jnp
from jax import lax
from jax.experimental import pallas as pl
from jax.experimental.pallas import tpu as pltpu


def _round_up(x, m):
    return -(-x // m) * m


def _make_masks(H, W, HWp, K):
    """Static 0/1 validity masks for every non-center conv tap.

    offs: list of (dy, dx) tap offsets (center excluded).
    masks: float32 (len(offs), HWp); masks[j, p] == 1 iff p = row*W + col has
    (row+dy, col+dx) inside the HxW image (exact zero-padding semantics).
    """
    half = K // 2
    offs = [(dy, dx) for dy in range(-half, half + 1)
            for dx in range(-half, half + 1) if (dy, dx) != (0, 0)]
    idx = np.arange(HWp)
    row = idx // W
    col = idx % W
    valid = idx < H * W
    masks = np.zeros((len(offs), HWp), dtype=np.float32)
    for j, (dy, dx) in enumerate(offs):
        ok = (valid & (row + dy >= 0) & (row + dy < H)
              & (col + dx >= 0) & (col + dx < W))
        masks[j] = ok.astype(np.float32)
    return offs, masks


def _make_kernel(*, C, W, HWp, bn, Ct, CB, K, offs, out_dtype):
    KK = K * K
    half = K // 2
    inv_c = 1.0 / C
    CH = 8  # full-sublane chunk for the channel reduction

    def reduce_chunk(x_ref):
        """Sum & max over the Ct channels of this block -> two (bn, HWp) f32."""
        if Ct <= CH:
            xb = x_ref[...].astype(jnp.float32)                # (bn, Ct, HWp)
            return jnp.sum(xb, axis=1), jnp.max(xb, axis=1)
        nfull = Ct // CH
        acc_s = x_ref[:, 0:CH, :].astype(jnp.float32)          # (bn, 8, HWp)
        acc_m = acc_s
        for i in range(1, nfull):                              # VALU accumulate
            xc = x_ref[:, i * CH:(i + 1) * CH, :].astype(jnp.float32)
            acc_s = acc_s + xc
            acc_m = jnp.maximum(acc_m, xc)
        s = jnp.sum(acc_s, axis=1)                             # one final reduce
        m = jnp.max(acc_m, axis=1)
        if Ct % CH:
            xr = x_ref[:, nfull * CH:Ct, :].astype(jnp.float32)
            s = s + jnp.sum(xr, axis=1)
            m = jnp.maximum(m, jnp.max(xr, axis=1))
        return s, m

    def conv_sigmoid_store(avg, mx, w_ref, mask_ref, o_ref):
        # Hoist all scalar (SMEM) weight reads out of the tap loop.
        w = [w_ref[i] for i in range(2 * KK)]

        # Center tap: no shift, always valid.
        acc = w[half * K + half] * avg + w[KK + half * K + half] * mx

        # Remaining taps: one lane-axis XLU roll per feature per tap; border
        # (wrapped) contributions dropped with a select (exact zero padding,
        # safe for non-finite inputs).
        for j, (dy, dx) in enumerate(offs):
            ky, kx = dy + half, dx + half
            w_avg = w[ky * K + kx]
            w_max = w[KK + ky * K + kx]
            shift = (-(dy * W + dx)) % HWp
            a_s = pltpu.roll(avg, shift, axis=1)
            m_s = pltpu.roll(mx, shift, axis=1)
            contrib = w_avg * a_s + w_max * m_s
            ok = mask_ref[j:j + 1, :] > 0.5                    # (1, HWp) bool
            acc = acc + jnp.where(ok, contrib, 0.0)

        o_ref[0] = jax.nn.sigmoid(acc).astype(out_dtype)

    def kernel(w_ref, mask_ref, x_ref, o_ref, sum_ref, max_ref):
        ps, pm = reduce_chunk(x_ref)

        if CB == 1:
            # Whole channel extent in one block: no accumulator round-trip.
            conv_sigmoid_store(ps * inv_c, pm, w_ref, mask_ref, o_ref)
            return

        c = pl.program_id(1)

        @pl.when(c == 0)
        def _():
            sum_ref[...] = ps
            max_ref[...] = pm

        @pl.when(c > 0)
        def _():
            sum_ref[...] = sum_ref[...] + ps
            max_ref[...] = jnp.maximum(max_ref[...], pm)

        @pl.when(c == pl.num_programs(1) - 1)
        def _():
            conv_sigmoid_store(sum_ref[...] * inv_c, max_ref[...],
                               w_ref, mask_ref, o_ref)

    return kernel


def spatial_attention(x, conv_weight):
    """x: (N, C, H, W); conv_weight: (1, 2, K, K). Returns (N, 1, H, W)."""
    N, C, H, W = x.shape
    K = conv_weight.shape[-1]
    HW = H * W
    HWp = _round_up(HW, 128)          # lane-dense, unmasked loads/stores
    itemsize = x.dtype.itemsize
    sub = max(8, 32 // itemsize)      # sublane multiple: 8 f32 / 16 bf16 / 32 i8

    # Lane-dense layout: flatten spatial dims, pad to a multiple of 128.
    x_flat = x.reshape(N, C, HW)
    if HWp != HW:
        x_flat = jnp.pad(x_flat, ((0, 0), (0, 0), (0, HWp - HW)))
    w_flat = conv_weight.reshape(-1).astype(jnp.float32)       # (2*K*K,) -> SMEM

    offs, masks_np = _make_masks(H, W, HWp, K)
    masks = jnp.asarray(masks_np)                              # (K*K-1, HWp) f32

    # ---- tiling choices -------------------------------------------------
    # Channel tile Ct (divisor of C): bound a single-batch input block to
    # <= 8 MiB so the double-buffered block fits every generation's scoped
    # VMEM (vmem_limit_bytes set to 32 MiB below, valid on v5e/v6e/v7x).
    in_block_budget = 8 * 1024 * 1024

    def cpad(c):
        return _round_up(c, sub)

    Ct = 1
    for d in sorted((d for d in range(1, C + 1) if C % d == 0), reverse=True):
        if cpad(d) * HWp * itemsize <= in_block_budget:
            Ct = d
            break
    CB = C // Ct

    # Batch tile bn (divisor of N): largest that fits the VMEM budget, but
    # keep >= 2 steps on the (parallel) batch axis when possible so both v7x
    # TensorCores get work and the DMA pipeline stays deep.
    per_elem_in = cpad(Ct) * HWp * itemsize
    mask_bytes = masks_np.size * 4

    def vmem_estimate(b):
        rows = max(b, 8)                                    # sublane padding
        x_blk = 2 * b * per_elem_in                         # double-buffered input
        o_blk = 2 * rows * HWp * itemsize                   # double-buffered output
        scratch = 2 * rows * HWp * 4                        # running sum / max
        temps = 12 * rows * HWp * 4                         # avg/max/acc/roll temps
        return x_blk + o_blk + scratch + temps + mask_bytes

    vmem_limit = 32 * 1024 * 1024
    fitting = [d for d in range(1, N + 1)
               if N % d == 0 and vmem_estimate(d) <= (vmem_limit * 3) // 4]
    preferred = [d for d in fitting if N // d >= 2]
    bn = max(preferred) if preferred else (max(fitting) if fitting else 1)
    G = N // bn

    kernel = _make_kernel(C=C, W=W, HWp=HWp, bn=bn, Ct=Ct, CB=CB, K=K,
                          offs=offs, out_dtype=x.dtype)

    out = pl.pallas_call(
        kernel,
        out_shape=jax.ShapeDtypeStruct((G, bn, HWp), x.dtype),
        grid_spec=pltpu.PrefetchScalarGridSpec(
            num_scalar_prefetch=0,
            grid=(G, CB),                                    # reduction axis last
            in_specs=[
                pl.BlockSpec(memory_space=pltpu.SMEM),                    # weights
                pl.BlockSpec((len(offs), HWp), lambda n, c: (0, 0)),      # masks
                pl.BlockSpec((bn, Ct, HWp), lambda n, c: (n, c, 0)),      # x
            ],
            out_specs=pl.BlockSpec((1, bn, HWp), lambda n, c: (n, 0, 0)),
            scratch_shapes=[pltpu.VMEM((bn, HWp), jnp.float32),
                            pltpu.VMEM((bn, HWp), jnp.float32)],
        ),
        compiler_params=pltpu.CompilerParams(
            dimension_semantics=("parallel", "arbitrary"),
            vmem_limit_bytes=vmem_limit,
        ),
    )(w_flat, masks, x_flat)

    return out.reshape(N, HWp)[:, :HW].reshape(N, 1, H, W)


def spatial_attention_ref(x, conv_weight):
    """Pure-JAX reference mirroring the PyTorch forward."""
    avg_out = jnp.mean(x, axis=1, keepdims=True)
    max_out = jnp.max(x, axis=1, keepdims=True)
    cat = jnp.concatenate([avg_out, max_out], axis=1)        # (N, 2, H, W)
    out = lax.conv_general_dilated(
        cat, conv_weight, window_strides=(1, 1), padding="SAME",
        dimension_numbers=("NCHW", "OIHW", "NCHW"))
    return jax.nn.sigmoid(out)


if __name__ == "__main__":
    key = jax.random.PRNGKey(0)
    kx, kw = jax.random.split(key)

    N, C, H, W = 2, 4, 16, 16
    x = jax.random.normal(kx, (N, C, H, W), dtype=jnp.float32)

    # Deterministic conv weight init (PyTorch-like Kaiming-uniform bound for
    # Conv2d(2, 1, 3): bound = 1/sqrt(fan_in) = 1/sqrt(2*3*3)).
    fan_in = 2 * 3 * 3
    bound = 1.0 / (fan_in ** 0.5)
    conv_weight = jax.random.uniform(
        kw, (1, 2, 3, 3), minval=-bound, maxval=bound, dtype=jnp.float32)

    out = spatial_attention(x, conv_weight)
    out = jax.block_until_ready(out)

    ref = spatial_attention_ref(x, conv_weight)
    assert out.shape == (N, 1, H, W)
    assert jnp.allclose(out, ref, atol=1e-5, rtol=1e-5), (
        f"max abs err {jnp.max(jnp.abs(out - ref))}")

    print("KERNEL_OK")
</pallas_src>

<mosaic_0001>
module attributes {stable_mosaic.version = 11 : i64} {
  func.func @kernel(%arg0: i32, %arg1: i32, %arg2: memref<18xf32, #tpu.memory_space<smem>>, %arg3: memref<8x256xf32, #tpu.memory_space<vmem>>, %arg4: memref<1x4x256xf32, #tpu.memory_space<vmem>>, %arg5: memref<1x1x256xf32, #tpu.memory_space<vmem>>, %arg6: memref<1x256xf32, #tpu.memory_space<vmem>>, %arg7: memref<1x256xf32, #tpu.memory_space<vmem>>) attributes {dimension_semantics = [#tpu.dimension_semantics<parallel>, #tpu.dimension_semantics<arbitrary>], iteration_bounds = array<i64: 2, 1>, scalar_prefetch = 0 : i64, scratch_operands = 2 : i64, tpu.core_type = #tpu.core_type<tc>, window_params = [{transform_indices = @transform_0, window_bounds = array<i64: 18>}, {pipeline_mode = #tpu.pipeline_mode<synchronous>, transform_indices = @transform_1, window_bounds = array<i64: 8, 256>}, {transform_indices = @transform_2, window_bounds = array<i64: 1, 4, 256>}, {transform_indices = @transform_3, window_bounds = array<i64: 1, 1, 256>}]} {
    %c0 = arith.constant 0 : index
    %c0_0 = arith.constant 0 : index
    %c0_1 = arith.constant 0 : index
    %0 = vector.load %arg4[%c0, %c0_0, %c0_1] : memref<1x4x256xf32, #tpu.memory_space<vmem>>, vector<1x4x256xf32>
    %cst = arith.constant dense<0.000000e+00> : vector<1x256xf32>
    %1 = vector.multi_reduction <add>, %0, %cst [1] : vector<1x4x256xf32> to vector<1x256xf32>
    %cst_2 = arith.constant dense<0xFF800000> : vector<1x256xf32>
    %2 = vector.multi_reduction <maximumf>, %0, %cst_2 [1] : vector<1x4x256xf32> to vector<1x256xf32>
    %cst_3 = arith.constant 2.500000e-01 : f32
    %3 = vector.broadcast %cst_3 : f32 to vector<1x256xf32>
    %4 = arith.mulf %1, %3 : vector<1x256xf32>
    %c0_4 = arith.constant 0 : index
    %5 = memref.load %arg2[%c0_4] : memref<18xf32, #tpu.memory_space<smem>>
    %c1 = arith.constant 1 : index
    %6 = memref.load %arg2[%c1] : memref<18xf32, #tpu.memory_space<smem>>
    %c2 = arith.constant 2 : index
    %7 = memref.load %arg2[%c2] : memref<18xf32, #tpu.memory_space<smem>>
    %c3 = arith.constant 3 : index
    %8 = memref.load %arg2[%c3] : memref<18xf32, #tpu.memory_space<smem>>
    %c4 = arith.constant 4 : index
    %9 = memref.load %arg2[%c4] : memref<18xf32, #tpu.memory_space<smem>>
    %c5 = arith.constant 5 : index
    %10 = memref.load %arg2[%c5] : memref<18xf32, #tpu.memory_space<smem>>
    %c6 = arith.constant 6 : index
    %11 = memref.load %arg2[%c6] : memref<18xf32, #tpu.memory_space<smem>>
    %c7 = arith.constant 7 : index
    %12 = memref.load %arg2[%c7] : memref<18xf32, #tpu.memory_space<smem>>
    %c8 = arith.constant 8 : index
    %13 = memref.load %arg2[%c8] : memref<18xf32, #tpu.memory_space<smem>>
    %c9 = arith.constant 9 : index
    %14 = memref.load %arg2[%c9] : memref<18xf32, #tpu.memory_space<smem>>
    %c10 = arith.constant 10 : index
    %15 = memref.load %arg2[%c10] : memref<18xf32, #tpu.memory_space<smem>>
    %c11 = arith.constant 11 : index
    %16 = memref.load %arg2[%c11] : memref<18xf32, #tpu.memory_space<smem>>
    %c12 = arith.constant 12 : index
    %17 = memref.load %arg2[%c12] : memref<18xf32, #tpu.memory_space<smem>>
    %c13 = arith.constant 13 : index
    %18 = memref.load %arg2[%c13] : memref<18xf32, #tpu.memory_space<smem>>
    %c14 = arith.constant 14 : index
    %19 = memref.load %arg2[%c14] : memref<18xf32, #tpu.memory_space<smem>>
    %c15 = arith.constant 15 : index
    %20 = memref.load %arg2[%c15] : memref<18xf32, #tpu.memory_space<smem>>
    %c16 = arith.constant 16 : index
    %21 = memref.load %arg2[%c16] : memref<18xf32, #tpu.memory_space<smem>>
    %c17 = arith.constant 17 : index
    %22 = memref.load %arg2[%c17] : memref<18xf32, #tpu.memory_space<smem>>
    %23 = vector.broadcast %9 : f32 to vector<1x256xf32>
    %24 = arith.mulf %23, %4 : vector<1x256xf32>
    %25 = vector.broadcast %18 : f32 to vector<1x256xf32>
    %26 = arith.mulf %25, %2 : vector<1x256xf32>
    %27 = arith.addf %24, %26 : vector<1x256xf32>
    %c17_i32 = arith.constant 17 : i32
    %28 = tpu.dynamic_rotate %4 by %c17_i32 dim 1 : vector<1x256xf32>, i32 -> vector<1x256xf32>
    %c17_i32_5 = arith.constant 17 : i32
    %29 = tpu.dynamic_rotate %2 by %c17_i32_5 dim 1 : vector<1x256xf32>, i32 -> vector<1x256xf32>
    %30 = vector.broadcast %5 : f32 to vector<1x256xf32>
    %31 = arith.mulf %30, %28 : vector<1x256xf32>
    %32 = vector.broadcast %14 : f32 to vector<1x256xf32>
    %33 = arith.mulf %32, %29 : vector<1x256xf32>
    %34 = arith.addf %31, %33 : vector<1x256xf32>
    %c0_6 = arith.constant 0 : index
    %c0_7 = arith.constant 0 : index
    %35 = vector.load %arg3[%c0_6, %c0_7] : memref<8x256xf32, #tpu.memory_space<vmem>>, vector<1x256xf32>
    %cst_8 = arith.constant 5.000000e-01 : f32
    %36 = vector.broadcast %cst_8 : f32 to vector<1x256xf32>
    %37 = arith.cmpf ogt, %35, %36 : vector<1x256xf32>
    %cst_9 = arith.constant 0.000000e+00 : f32
    %38 = vector.broadcast %cst_9 : f32 to vector<1x256xf32>
    %39 = arith.select %37, %34, %38 : vector<1x256xi1>, vector<1x256xf32>
    %40 = arith.addf %27, %39 : vector<1x256xf32>
    %c16_i32 = arith.constant 16 : i32
    %41 = tpu.dynamic_rotate %4 by %c16_i32 dim 1 : vector<1x256xf32>, i32 -> vector<1x256xf32>
    %c16_i32_10 = arith.constant 16 : i32
    %42 = tpu.dynamic_rotate %2 by %c16_i32_10 dim 1 : vector<1x256xf32>, i32 -> vector<1x256xf32>
    %43 = vector.broadcast %6 : f32 to vector<1x256xf32>
    %44 = arith.mulf %43, %41 : vector<1x256xf32>
    %45 = vector.broadcast %15 : f32 to vector<1x256xf32>
    %46 = arith.mulf %45, %42 : vector<1x256xf32>
    %47 = arith.addf %44, %46 : vector<1x256xf32>
    %c1_11 = arith.constant 1 : index
    %c0_12 = arith.constant 0 : index
    %48 = vector.load %arg3[%c1_11, %c0_12] : memref<8x256xf32, #tpu.memory_space<vmem>>, vector<1x256xf32>
    %cst_13 = arith.constant 5.000000e-01 : f32
    %49 = vector.broadcast %cst_13 : f32 to vector<1x256xf32>
    %50 = arith.cmpf ogt, %48, %49 : vector<1x256xf32>
    %cst_14 = arith.constant 0.000000e+00 : f32
    %51 = vector.broadcast %cst_14 : f32 to vector<1x256xf32>
    %52 = arith.select %50, %47, %51 : vector<1x256xi1>, vector<1x256xf32>
    %53 = arith.addf %40, %52 : vector<1x256xf32>
    %c15_i32 = arith.constant 15 : i32
    %54 = tpu.dynamic_rotate %4 by %c15_i32 dim 1 : vector<1x256xf32>, i32 -> vector<1x256xf32>
    %c15_i32_15 = arith.constant 15 : i32
    %55 = tpu.dynamic_rotate %2 by %c15_i32_15 dim 1 : vector<1x256xf32>, i32 -> vector<1x256xf32>
    %56 = vector.broadcast %7 : f32 to vector<1x256xf32>
    %57 = arith.mulf %56, %54 : vector<1x256xf32>
    %58 = vector.broadcast %16 : f32 to vector<1x256xf32>
    %59 = arith.mulf %58, %55 : vector<1x256xf32>
    %60 = arith.addf %57, %59 : vector<1x256xf32>
    %c2_16 = arith.constant 2 : index
    %c0_17 = arith.constant 0 : index
    %61 = vector.load %arg3[%c2_16, %c0_17] : memref<8x256xf32, #tpu.memory_space<vmem>>, vector<1x256xf32>
    %cst_18 = arith.constant 5.000000e-01 : f32
    %62 = vector.broadcast %cst_18 : f32 to vector<1x256xf32>
    %63 = arith.cmpf ogt, %61, %62 : vector<1x256xf32>
    %cst_19 = arith.constant 0.000000e+00 : f32
    %64 = vector.broadcast %cst_19 : f32 to vector<1x256xf32>
    %65 = arith.select %63, %60, %64 : vector<1x256xi1>, vector<1x256xf32>
    %66 = arith.addf %53, %65 : vector<1x256xf32>
    %c1_i32 = arith.constant 1 : i32
    %67 = tpu.dynamic_rotate %4 by %c1_i32 dim 1 : vector<1x256xf32>, i32 -> vector<1x256xf32>
    %c1_i32_20 = arith.constant 1 : i32
    %68 = tpu.dynamic_rotate %2 by %c1_i32_20 dim 1 : vector<1x256xf32>, i32 -> vector<1x256xf32>
    %69 = vector.broadcast %8 : f32 to vector<1x256xf32>
    %70 = arith.mulf %69, %67 : vector<1x256xf32>
    %71 = vector.broadcast %17 : f32 to vector<1x256xf32>
    %72 = arith.mulf %71, %68 : vector<1x256xf32>
    %73 = arith.addf %70, %72 : vector<1x256xf32>
    %c3_21 = arith.constant 3 : index
    %c0_22 = arith.constant 0 : index
    %74 = vector.load %arg3[%c3_21, %c0_22] : memref<8x256xf32, #tpu.memory_space<vmem>>, vector<1x256xf32>
    %cst_23 = arith.constant 5.000000e-01 : f32
    %75 = vector.broadcast %cst_23 : f32 to vector<1x256xf32>
    %76 = arith.cmpf ogt, %74, %75 : vector<1x256xf32>
    %cst_24 = arith.constant 0.000000e+00 : f32
    %77 = vector.broadcast %cst_24 : f32 to vector<1x256xf32>
    %78 = arith.select %76, %73, %77 : vector<1x256xi1>, vector<1x256xf32>
    %79 = arith.addf %66, %78 : vector<1x256xf32>
    %c255_i32 = arith.constant 255 : i32
    %80 = tpu.dynamic_rotate %4 by %c255_i32 dim 1 : vector<1x256xf32>, i32 -> vector<1x256xf32>
    %c255_i32_25 = arith.constant 255 : i32
    %81 = tpu.dynamic_rotate %2 by %c255_i32_25 dim 1 : vector<1x256xf32>, i32 -> vector<1x256xf32>
    %82 = vector.broadcast %10 : f32 to vector<1x256xf32>
    %83 = arith.mulf %82, %80 : vector<1x256xf32>
    %84 = vector.broadcast %19 : f32 to vector<1x256xf32>
    %85 = arith.mulf %84, %81 : vector<1x256xf32>
    %86 = arith.addf %83, %85 : vector<1x256xf32>
    %c4_26 = arith.constant 4 : index
    %c0_27 = arith.constant 0 : index
    %87 = vector.load %arg3[%c4_26, %c0_27] : memref<8x256xf32, #tpu.memory_space<vmem>>, vector<1x256xf32>
    %cst_28 = arith.constant 5.000000e-01 : f32
    %88 = vector.broadcast %cst_28 : f32 to vector<1x256xf32>
    %89 = arith.cmpf ogt, %87, %88 : vector<1x256xf32>
    %cst_29 = arith.constant 0.000000e+00 : f32
    %90 = vector.broadcast %cst_29 : f32 to vector<1x256xf32>
    %91 = arith.select %89, %86, %90 : vector<1x256xi1>, vector<1x256xf32>
    %92 = arith.addf %79, %91 : vector<1x256xf32>
    %c241_i32 = arith.constant 241 : i32
    %93 = tpu.dynamic_rotate %4 by %c241_i32 dim 1 : vector<1x256xf32>, i32 -> vector<1x256xf32>
    %c241_i32_30 = arith.constant 241 : i32
    %94 = tpu.dynamic_rotate %2 by %c241_i32_30 dim 1 : vector<1x256xf32>, i32 -> vector<1x256xf32>
    %95 = vector.broadcast %11 : f32 to vector<1x256xf32>
    %96 = arith.mulf %95, %93 : vector<1x256xf32>
    %97 = vector.broadcast %20 : f32 to vector<1x256xf32>
    %98 = arith.mulf %97, %94 : vector<1x256xf32>
    %99 = arith.addf %96, %98 : vector<1x256xf32>
    %c5_31 = arith.constant 5 : index
    %c0_32 = arith.constant 0 : index
    %100 = vector.load %arg3[%c5_31, %c0_32] : memref<8x256xf32, #tpu.memory_space<vmem>>, vector<1x256xf32>
    %cst_33 = arith.constant 5.000000e-01 : f32
    %101 = vector.broadcast %cst_33 : f32 to vector<1x256xf32>
    %102 = arith.cmpf ogt, %100, %101 : vector<1x256xf32>
    %cst_34 = arith.constant 0.000000e+00 : f32
    %103 = vector.broadcast %cst_34 : f32 to vector<1x256xf32>
    %104 = arith.select %102, %99, %103 : vector<1x256xi1>, vector<1x256xf32>
    %105 = arith.addf %92, %104 : vector<1x256xf32>
    %c240_i32 = arith.constant 240 : i32
    %106 = tpu.dynamic_rotate %4 by %c240_i32 dim 1 : vector<1x256xf32>, i32 -> vector<1x256xf32>
    %c240_i32_35 = arith.constant 240 : i32
    %107 = tpu.dynamic_rotate %2 by %c240_i32_35 dim 1 : vector<1x256xf32>, i32 -> vector<1x256xf32>
    %108 = vector.broadcast %12 : f32 to vector<1x256xf32>
    %109 = arith.mulf %108, %106 : vector<1x256xf32>
    %110 = vector.broadcast %21 : f32 to vector<1x256xf32>
    %111 = arith.mulf %110, %107 : vector<1x256xf32>
    %112 = arith.addf %109, %111 : vector<1x256xf32>
    %c6_36 = arith.constant 6 : index
    %c0_37 = arith.constant 0 : index
    %113 = vector.load %arg3[%c6_36, %c0_37] : memref<8x256xf32, #tpu.memory_space<vmem>>, vector<1x256xf32>
    %cst_38 = arith.constant 5.000000e-01 : f32
    %114 = vector.broadcast %cst_38 : f32 to vector<1x256xf32>
    %115 = arith.cmpf ogt, %113, %114 : vector<1x256xf32>
    %cst_39 = arith.constant 0.000000e+00 : f32
    %116 = vector.broadcast %cst_39 : f32 to vector<1x256xf32>
    %117 = arith.select %115, %112, %116 : vector<1x256xi1>, vector<1x256xf32>
    %118 = arith.addf %105, %117 : vector<1x256xf32>
    %c239_i32 = arith.constant 239 : i32
    %119 = tpu.dynamic_rotate %4 by %c239_i32 dim 1 : vector<1x256xf32>, i32 -> vector<1x256xf32>
    %c239_i32_40 = arith.constant 239 : i32
    %120 = tpu.dynamic_rotate %2 by %c239_i32_40 dim 1 : vector<1x256xf32>, i32 -> vector<1x256xf32>
    %121 = vector.broadcast %13 : f32 to vector<1x256xf32>
    %122 = arith.mulf %121, %119 : vector<1x256xf32>
    %123 = vector.broadcast %22 : f32 to vector<1x256xf32>
    %124 = arith.mulf %123, %120 : vector<1x256xf32>
    %125 = arith.addf %122, %124 : vector<1x256xf32>
    %c7_41 = arith.constant 7 : index
    %c0_42 = arith.constant 0 : index
    %126 = vector.load %arg3[%c7_41, %c0_42] : memref<8x256xf32, #tpu.memory_space<vmem>>, vector<1x256xf32>
    %cst_43 = arith.constant 5.000000e-01 : f32
    %127 = vector.broadcast %cst_43 : f32 to vector<1x256xf32>
    %128 = arith.cmpf ogt, %126, %127 : vector<1x256xf32>
    %cst_44 = arith.constant 0.000000e+00 : f32
    %129 = vector.broadcast %cst_44 : f32 to vector<1x256xf32>
    %130 = arith.select %128, %125, %129 : vector<1x256xi1>, vector<1x256xf32>
    %131 = arith.addf %118, %130 : vector<1x256xf32>
    %132 = arith.negf %131 : vector<1x256xf32>
    %133 = math.exp %132 : vector<1x256xf32>
    %cst_45 = arith.constant 1.000000e+00 : f32
    %134 = vector.broadcast %cst_45 : f32 to vector<1x256xf32>
    %135 = arith.addf %134, %133 : vector<1x256xf32>
    %136 = arith.divf %134, %135 : vector<1x256xf32>
    %c0_46 = arith.constant 0 : index
    %c0_47 = arith.constant 0 : index
    %c0_48 = arith.constant 0 : index
    %137 = vector.load %arg5[%c0_46, %c0_47, %c0_48] : memref<1x1x256xf32, #tpu.memory_space<vmem>>, vector<1x1x256xf32>
    %138 = vector.shape_cast %137 : vector<1x1x256xf32> to vector<1x256xf32>
    %139 = vector.shape_cast %136 : vector<1x256xf32> to vector<1x1x256xf32>
    tpu.vector_store %arg5[%c0_46, %c0_47, %c0_48], %139 {strides = array<i32>} : memref<1x1x256xf32, #tpu.memory_space<vmem>>, vector<1x1x256xf32>,
    return
  }
  func.func @transform_0(%arg0: i32, %arg1: i32) -> i32 {
    %c0_i32 = arith.constant 0 : i32
    %c0_i32_0 = arith.constant 0 : i32
    return %c0_i32 : i32
  }
  func.func @transform_1(%arg0: i32, %arg1: i32) -> (i32, i32) {
    %c0_i32 = arith.constant 0 : i32
    %c0_i32_0 = arith.constant 0 : i32
    %c0_i32_1 = arith.constant 0 : i32
    return %c0_i32, %c0_i32_0 : i32, i32
  }
  func.func @transform_2(%arg0: i32, %arg1: i32) -> (i32, i32, i32) {
    %c0_i32 = arith.constant 0 : i32
    %c0_i32_0 = arith.constant 0 : i32
    return %arg0, %arg1, %c0_i32 : i32, i32, i32
  }
  func.func @transform_3(%arg0: i32, %arg1: i32) -> (i32, i32, i32) {
    %c0_i32 = arith.constant 0 : i32
    %c0_i32_0 = arith.constant 0 : i32
    %c0_i32_1 = arith.constant 0 : i32
    return %arg0, %c0_i32, %c0_i32_0 : i32, i32, i32
  }
}

</mosaic_0001>

<llo_original>
// kernel: tpu_custom_call.1
$region0: #{tpu_custom_call.1}
  #allocation0 [shape = 'u32[]', space=smem, size = 0x4, offset = 0x4, fixed_abs, tag = 'smem constant byte address 0x4 - core index']
  #allocation1 [shape = 'u32[144,128]{1,0:T(1,128)}', space=vmem, size = 0x12000, scoped, tag = 'internal scratch']
  #allocation2 [shape = 'f32[1,256]{1,0:T(1,128)}', space=vmem, size = 0x400, scoped, tag = 'scratch operand']
  #allocation3 [shape = 'f32[1,256]{1,0:T(1,128)}', space=vmem, size = 0x400, scoped, tag = 'scratch operand']
  %s0 = inlined_call_operand.hbm [shape: f32[18], index: 0, kind: input, shape index: {}]
  %s1 = inlined_call_operand.hbm [shape: f32[8,256], index: 1, kind: input, shape index: {}]
  %s2 = inlined_call_operand.hbm [shape: f32[2,4,256], index: 2, kind: input, shape index: {}]
  %s3 = inlined_call_operand.hbm [shape: f32[2,1,256], index: 3, kind: output, shape index: {}]
  %s4 = sld [smem:[#allocation0]]
  $region57: #{tpu_custom_call.1} parent=0
    _
  %s6 = ssub.s32 1, %s4
  %s7 = scalar_select 0, %s6, %s4
  $region1: #{tpu_custom_call.1} parent=0
    #allocation4 [shape = 'u8[512]{0}', space=smem, size = 0x200, scoped, tag = 'input window, operand 0, single buffered']
    #allocation5 [shape = 's32[2]{0}', space=sflag, size = 0x8, scoped, tag = 'scoped memory for tpu_custom_call.1']
    #allocation6 [shape = 's32[2]{0}', space=sflag, size = 0x8, scoped, tag = 'scoped memory for tpu_custom_call.1']
    #allocation7 [shape = 's32[2]{0}', space=sflag, size = 0x8, scoped, tag = 'scoped memory for tpu_custom_call.1']
    #allocation8 [shape = 'u8[8192]{0}', space=vmem, size = 0x2000, scoped, tag = 'input window, operand 1, single buffered']
    #allocation9 [shape = 'u8[8192]{0}', space=vmem, size = 0x2000, scoped, tag = 'input window, operand 2']
    #allocation10 [shape = 's32[2]{0}', space=sflag, size = 0x8, scoped, tag = 'scoped memory for tpu_custom_call.1']
    #allocation11 [shape = 'u8[2048]{0}', space=vmem, size = 0x800, scoped, tag = 'output window, operand 0']
    %8 = vsyncpa [#allocation7], 0
    %9 = vsyncpa [#allocation5], 0
    %10 = vsyncpa [#allocation10], 0
    %s11 = scalar_lea.sflag [#allocation10], 1
    %12 = vsyncpa %s11, 0
    %13 = vsyncpa [#allocation6], 0
    %s14 = scalar_lea.sflag [#allocation6], 1
    %15 = vsyncpa %s14, 0
    loop: start=0, step=1, limit=4
    $region2: #{tpu_custom_call.1} parent=1 // loop_pre_header
      _
    $region3: #{tpu_custom_call.1} parent=1 // loop_header
      %s17 = sphi 0, %s21
      %p18 = scmp.ge.s32.totalorder %s17, 4
      %s24 = sphi 0, %s36
      %s25 = sphi 0, %s32
      %s26 = sphi 0, %s24
      %s27 = sphi 0, %s25
      %s28 = sphi 0, %s26
      %s29 = sphi 0, %s27
      %s37 = sphi 0, %s37
      %s39 = sphi 0, %s37
      %s40 = sphi 0, %s39
      %s54 = sphi 0, %s40
      %s58 = sphi 0, %s58
      %s60 = sphi 0, %s58
      %s61 = sphi 0, %s60
      %s75 = sphi 0, %s61
      %s83 = sphi 0, %s85
      %s86 = sphi 0, %s83
      %s87 = sphi 0, %s86
      %s103 = sphi 0, %s87
      %s109 = sphi 0, %s111
      %s112 = sphi 0, %s109
      %s113 = sphi 0, %s112
      %s129 = sphi 0, %s113
    $region4: #{tpu_custom_call.1} parent=1 // loop_header_branch
      %20 = sbr.rel (%p18) target = $region8
    $region5: #{tpu_custom_call.1} parent=1 // loop_body
      %s22 = ssub.s32 %s17, 1
      %s23 = ssub.s32 %s17, 2
      %s30 = sadd.s32 1, %s25
      %p31 = scmp.ge.s32.totalorder %s30, 1
      %s32 = scalar_select %p31, 0, %s30
      %s33 = sadd.s32 1, %s24
      %s34 = scalar_select %p31, %s33, %s24
      %p35 = scmp.ge.s32.totalorder %s34, 2
      %s36 = scalar_select %p35, 0, %s34
      %s38 = sadd.s32 %s37, 1
      %p41 = scmp.eq.s32.totalorder %s17, 1
      %p42 = scmp.ne.s32.totalorder %s37, %s39
      %p43 = scmp.eq.s32.totalorder %s17, 0
      %p44 = por %p42, %p43
      %p45 = scmp.ne.s32.totalorder %s37, %s39
      %p46 = scmp.eq.s32.totalorder %s22, 1
      %p47 = por %p45, %p46
      %p48 = scmp.ne.s32.totalorder %s39, %s40
      %p49 = scmp.eq.s32.totalorder %s22, 0
      %p50 = por %p48, %p49
      %p51 = scmp.ne.s32.totalorder %s39, %s40
      %p52 = scmp.eq.s32.totalorder %s23, 1
      %p53 = por %p51, %p52
      %p55 = scmp.ne.s32.totalorder %s40, %s54
      %p56 = scmp.eq.s32.totalorder %s23, 0
      %p57 = por %p55, %p56
      %s59 = sadd.s32 %s58, 1
      %p62 = scmp.eq.s32.totalorder %s17, 1
      %p63 = scmp.ne.s32.totalorder %s58, %s60
      %p64 = scmp.eq.s32.totalorder %s17, 0
      %p65 = por %p63, %p64
      %p66 = scmp.ne.s32.totalorder %s58, %s60
      %p67 = scmp.eq.s32.totalorder %s22, 1
      %p68 = por %p66, %p67
      %p69 = scmp.ne.s32.totalorder %s60, %s61
      %p70 = scmp.eq.s32.totalorder %s22, 0
      %p71 = por %p69, %p70
      %p72 = scmp.ne.s32.totalorder %s60, %s61
      %p73 = scmp.eq.s32.totalorder %s23, 1
      %p74 = por %p72, %p73
      %p76 = scmp.ne.s32.totalorder %s61, %s75
      %p77 = scmp.eq.s32.totalorder %s23, 0
      %p78 = por %p76, %p77
      %s79 = ssub.s32 %s24, %s36
      %s80 = ssub.s32 %s25, %s32
      %s81 = sor.u32 %s79, %s80
      %p82 = scmp.eq.s32.totalorder %s81, 0
      %s84 = sadd.s32 %s83, 1
      %s85 = scalar_select %p82, %s83, %s84
      %p88 = pneg %p82
      %p89 = scmp.eq.s32.totalorder %s17, 1
      %p90 = por %p88, %p89
      %p91 = scmp.ne.s32.totalorder %s83, %s86
      %p92 = scmp.eq.s32.totalorder %s17, 0
      %p93 = por %p91, %p92
      %p94 = scmp.ne.s32.totalorder %s83, %s86
      %p95 = scmp.eq.s32.totalorder %s22, 1
      %p96 = por %p94, %p95
      %p97 = scmp.ne.s32.totalorder %s86, %s87
      %p98 = scmp.eq.s32.totalorder %s22, 0
      %p99 = por %p97, %p98
      %p100 = scmp.ne.s32.totalorder %s86, %s87
      %p101 = scmp.eq.s32.totalorder %s23, 1
      %p102 = por %p100, %p101
      %p104 = scmp.ne.s32.totalorder %s87, %s103
      %p105 = scmp.eq.s32.totalorder %s23, 0
      %p106 = por %p104, %p105
      %s107 = ssub.s32 %s24, %s36
      %p108 = scmp.eq.s32.totalorder %s107, 0
      %s110 = sadd.s32 %s109, 1
      %s111 = scalar_select %p108, %s109, %s110
      %p114 = pneg %p108
      %p115 = scmp.eq.s32.totalorder %s17, 1
      %p116 = por %p114, %p115
      %p117 = scmp.ne.s32.totalorder %s109, %s112
      %p118 = scmp.eq.s32.totalorder %s17, 0
      %p119 = por %p117, %p118
      %p120 = scmp.ne.s32.totalorder %s109, %s112
      %p121 = scmp.eq.s32.totalorder %s22, 1
      %p122 = por %p120, %p121
      %p123 = scmp.ne.s32.totalorder %s112, %s113
      %p124 = scmp.eq.s32.totalorder %s22, 0
      %p125 = por %p123, %p124
      %p126 = scmp.ne.s32.totalorder %s112, %s113
      %p127 = scmp.eq.s32.totalorder %s23, 1
      %p128 = por %p126, %p127
      %p130 = scmp.ne.s32.totalorder %s113, %s129
      %p131 = scmp.eq.s32.totalorder %s23, 0
      %p132 = por %p130, %p131
      %p133 = scmp.le.s32.totalorder 1, %s17
      %p134 = scmp.lt.s32.totalorder %s17, 3
      %p135 = pnand %p133, %p134
      %p136 = pneg %p135
      // Predicated region
      $region9: #{tpu_custom_call.1} parent=5 // pred_check
        _
      $region10: #{tpu_custom_call.1} parent=5 // pred_check_branch
        %138 = sbr.rel (%p135) target = $region12
      $region11: #{tpu_custom_call.1} parent=5 // pred_region
        %s139 = ssub.s32 %s17, 1
        // Predicated region
        $region13: #{tpu_custom_call.1} parent=11 // pred_check
          %p140 = pneg %p50
        $region14: #{tpu_custom_call.1} parent=11 // pred_check_branch
          %142 = sbr.rel (%p140) target = $region16
        $region15: #{tpu_custom_call.1} parent=11 // pred_region
          %s144 = ssub.s32 16, 16
          %145 = vsyncadd [#allocation7], %s144
          %148 = dma.hbm_to_smem %s0, 16, [#allocation4], [#allocation7]
        $region16: #{tpu_custom_call.1} parent=11 // pred_fallthru
          _
        // Predicated region
        $region17: #{tpu_custom_call.1} parent=11 // pred_check
          %p149 = pneg %p71
        $region18: #{tpu_custom_call.1} parent=11 // pred_check_branch
          %151 = sbr.rel (%p149) target = $region20
        $region19: #{tpu_custom_call.1} parent=11 // pred_region
          %s153 = ssub.s32 256, 256
          %154 = vsyncadd [#allocation5], %s153
          %s156 = sshll.u32 [#allocation8], 4
          %s157 = int_to_ptr.vmem [resolvable:$true] %s156
          %159 = dma.hbm_to_vmem [thread:$0]  %s1, 256, %s157, [#allocation5]
        $region20: #{tpu_custom_call.1} parent=11 // pred_fallthru
          _
      $region12: #{tpu_custom_call.1} parent=5 // pred_fallthru
        _
      %p160 = scmp.lt.s32.totalorder %s17, 2
      // Predicated region
      $region21: #{tpu_custom_call.1} parent=5 // pred_check
        %p161 = pneg %p160
      $region22: #{tpu_custom_call.1} parent=5 // pred_check_branch
        %163 = sbr.rel (%p161) target = $region24
      $region23: #{tpu_custom_call.1} parent=5 // pred_region
        // Predicated region
        $region25: #{tpu_custom_call.1} parent=23 // pred_check
          %p164 = pneg %p93
        $region26: #{tpu_custom_call.1} parent=23 // pred_check_branch
          %166 = sbr.rel (%p164) target = $region28
        $region27: #{tpu_custom_call.1} parent=23 // pred_region
          %s167 = sand.u32 %s83, 1
          %s168 = scalar_lea.sflag [#allocation10], %s167
          %s169 = sand.u32 %s83, 1
          %s170 = smul.addr %s169, 8
          %s171 = scalar_lea.vmem [#allocation9], %s170
          %s173 = ssub.s32 128, 128
          %174 = vsyncadd %s168, %s173
          %s175 = smul.addr %s25, 2
          %s176 = smul.addr %s24, 2
          %s177 = sadd.s32 %s175, %s176
          %s178 = smul.addr %s177, 64
          %s179 = scalar_lea.hbm %s2, %s178
          %s181 = sshll.u32 %s171, 4
          %s182 = int_to_ptr.vmem [resolvable:$true] %s181
          %184 = dma.hbm_to_vmem [thread:$0]  %s179, 128, %s182, %s168
        $region28: #{tpu_custom_call.1} parent=23 // pred_fallthru
          _
      $region24: #{tpu_custom_call.1} parent=5 // pred_fallthru
        _
      %p185 = scmp.le.s32.totalorder 1, %s17
      %p186 = scmp.lt.s32.totalorder %s17, 3
      %p187 = pnand %p185, %p186
      %p188 = pneg %p187
      // Predicated region
      $region29: #{tpu_custom_call.1} parent=5 // pred_check
        _
      $region30: #{tpu_custom_call.1} parent=5 // pred_check_branch
        %190 = sbr.rel (%p187) target = $region32
      $region31: #{tpu_custom_call.1} parent=5 // pred_region
        %s191 = ssub.s32 %s17, 1
        // Predicated region
        $region33: #{tpu_custom_call.1} parent=31 // pred_check
          %p192 = pneg %p50
        $region34: #{tpu_custom_call.1} parent=31 // pred_check_branch
          %194 = sbr.rel (%p192) target = $region36
        $region35: #{tpu_custom_call.1} parent=31 // pred_region
          %195 = dma.done [#allocation7], 16
        $region36: #{tpu_custom_call.1} parent=31 // pred_fallthru
          _
        // Predicated region
        $region37: #{tpu_custom_call.1} parent=31 // pred_check
          %p196 = pneg %p71
        $region38: #{tpu_custom_call.1} parent=31 // pred_check_branch
          %198 = sbr.rel (%p196) target = $region40
        $region39: #{tpu_custom_call.1} parent=31 // pred_region
          %199 = dma.done [#allocation5], 256
        $region40: #{tpu_custom_call.1} parent=31 // pred_fallthru
          _
        %s200 = sand.u32 %s86, 1
        %s201 = scalar_lea.sflag [#allocation10], %s200
        %s202 = sand.u32 %s86, 1
        %s203 = smul.addr %s202, 8
        %s204 = scalar_lea.vmem [#allocation9], %s203
        // Predicated region
        $region41: #{tpu_custom_call.1} parent=31 // pred_check
          %p205 = pneg %p99
        $region42: #{tpu_custom_call.1} parent=31 // pred_check_branch
          %207 = sbr.rel (%p205) target = $region44
        $region43: #{tpu_custom_call.1} parent=31 // pred_region
          %208 = dma.done %s201, 128
        $region44: #{tpu_custom_call.1} parent=31 // pred_fallthru
          _
        %209 = sfence
        %p210 = pneg %p50
        %p211 = pneg %p47
        %p212 = pneg %p71
        %p213 = pneg %p68
        %s214 = sand.u32 %s86, 1
        %s215 = scalar_lea.sflag [#allocation10], %s214
        %s216 = sand.u32 %s86, 1
        %s217 = smul.addr %s216, 8
        %s218 = scalar_lea.vmem [#allocation9], %s217
        %p219 = pneg %p99
        %p220 = pneg %p96
        %p221 = pneg %p125
        %p222 = pneg %p122
        %s223 = sand.u32 %s112, 1
        %s224 = scalar_lea.sflag [#allocation6], %s223
        %s225 = sand.u32 %s112, 1
        %s226 = smul.addr %s225, 2
        %s227 = scalar_lea.vmem [#allocation11], %s226
        %v228 = vld [vmem:[%s204] sm:$0xff]
        %v230 = vcombine.high %v228, %v228
        %vm232 = vcmask 1043456
        %v233 = vsel %vm232, %v228, 0.0
        %v234 = vrot.slane %v233, 4
        %v235 = vadd.f32 %v233, %v234
        %v236 = vrot.slane %v235, 2
        %v237 = vadd.f32 %v235, %v236
        %v238 = vrot.slane %v237, 1
        %v239 = vadd.f32 %v237, %v238
        %v240 = vsel %vm232, %v230, 0.0
        %v241 = vrot.slane %v240, 4
        %v242 = vadd.f32 %v240, %v241
        %v243 = vrot.slane %v242, 2
        %v244 = vadd.f32 %v242, %v243
        %v245 = vrot.slane %v244, 1
        %v246 = vadd.f32 %v244, %v245
        %v247 = vsel %vm232, %v228, -inf
        %v248 = vrot.slane %v247, 4
        %v249 = vmax.f32 %v247, %v248
        %v250 = vrot.slane %v249, 2
        %v251 = vmax.f32 %v249, %v250
        %v252 = vrot.slane %v251, 1
        %v253 = vmax.f32 %v251, %v252
        %v254 = vsel %vm232, %v230, -inf
        %v255 = vrot.slane %v254, 4
        %v256 = vmax.f32 %v254, %v255
        %v257 = vrot.slane %v256, 2
        %v258 = vmax.f32 %v256, %v257
        %v259 = vrot.slane %v258, 1
        %v260 = vmax.f32 %v258, %v259
        %v261 = vmul.f32 %v239, 0.25
        %v262 = vmul.f32 %v246, 0.25
        %s263 = sld [smem:[#allocation4]]
        %s264 = sld [smem:[#allocation4 + $0x1]]
        %s265 = sld [smem:[#allocation4 + $0x2]]
        %s266 = sld [smem:[#allocation4 + $0x3]]
        %s267 = sld [smem:[#allocation4 + $0x4]]
        %s268 = sld [smem:[#allocation4 + $0x5]]
        %s269 = sld [smem:[#allocation4 + $0x6]]
        %s270 = sld [smem:[#allocation4 + $0x7]]
        %s271 = sld [smem:[#allocation4 + $0x8]]
        %s272 = sld [smem:[#allocation4 + $0x9]]
        %s273 = sld [smem:[#allocation4 + $0xa]]
        %s274 = sld [smem:[#allocation4 + $0xb]]
        %s275 = sld [smem:[#allocation4 + $0xc]]
        %s276 = sld [smem:[#allocation4 + $0xd]]
        %s277 = sld [smem:[#allocation4 + $0xe]]
        %s278 = sld [smem:[#allocation4 + $0xf]]
        %s279 = sld [smem:[#allocation4 + $0x10]]
        %s280 = sld [smem:[#allocation4 + $0x11]]
        %v281 = vstv %s267
        %v282 = vmul.f32 %v281, %v261
        %v283 = vmul.f32 %v281, %v262
        %v284 = vstv %s276
        %v285 = vmul.f32 %v284, %v253
        %v286 = vmul.f32 %v284, %v260
        %v287 = vadd.f32 %v282, %v285
        %v288 = vadd.f32 %v283, %v286
        %289 = vrot.lane.b32.xlu0 %v261, 17
        %v290 = vpop.permute.xlu0 %289
        %291 = vrot.lane.b32.xlu0 %v262, 17
        %v292 = vpop.permute.xlu0 %291
        %v293 = vlaneseq
        %v294 = vand.u32 %v293, 127
        %vm295 = vcmp.lt.s32.totalorder %v294, 17
        %v296 = vsel %vm295, %v290, %v292
        %v297 = vsel %vm295, %v292, %v290
        %298 = vrot.lane.b32.xlu0 %v253, 17
        %v299 = vpop.permute.xlu0 %298
        %300 = vrot.lane.b32.xlu0 %v260, 17
        %v301 = vpop.permute.xlu0 %300
        %v302 = vsel %vm295, %v299, %v301
        %v303 = vsel %vm295, %v301, %v299
        %v304 = vstv %s263
        %v305 = vmul.f32 %v304, %v297
        %v306 = vmul.f32 %v304, %v296
        %v307 = vstv %s272
        %v308 = vmul.f32 %v307, %v303
        %v309 = vmul.f32 %v307, %v302
        %v310 = vadd.f32 %v305, %v308
        %v311 = vadd.f32 %v306, %v309
        %v312 = vld [vmem:[#allocation8] ss:$8 sm:$0x3]
        %vm313 = vcmp.gt.f32.partialorder %v312, 0.5
        %v316 = vcombine.low %v310, %v311
        %v318 = vunpack.c.l.s4 1966171168
        %v319 = vunpack.c.0.s8 %v318
        %v320 = vlaneseq
        %v321 = vshrl.u32 %v320, 7
        %v322 = vsub.s32 %v319, %v321
        %v323 = vrot.slane %v316, %v322
        %v325 = vunpack.c.l.s4 1966171168
        %v326 = vunpack.c.0.s8 %v325
        %v327 = vlaneseq
        %v328 = vshrl.u32 %v327, 7
        %v329 = vsub.s32 %v326, %v328
        %v330 = vrot.slane %v323, %v329
        %v332 = vsel %vm313, %v330, 0.0
        %v334 = vlaneseq
        %v335 = vshrl.u32 %v334, 7
        %v336 = vsub.s32 0, %v335
        %v337 = vrot.slane %v332, %v336
        %v338 = vlaneseq
        %v339 = vshrl.u32 %v338, 7
        %v340 = vsub.s32 1, %v339
        %v341 = vrot.slane %v332, %v340
        %v344 = vadd.f32 %v287, %v337
        %v345 = vadd.f32 %v288, %v341
        %346 = vrot.lane.b32.xlu0 %v261, 16
        %v347 = vpop.permute.xlu0 %346
        %348 = vrot.lane.b32.xlu0 %v262, 16
        %v349 = vpop.permute.xlu0 %348
        %vm350 = vcmp.lt.s32.totalorder %v294, 16
        %v351 = vsel %vm350, %v347, %v349
        %v352 = vsel %vm350, %v349, %v347
        %353 = vrot.lane.b32.xlu0 %v253, 16
        %v354 = vpop.permute.xlu0 %353
        %355 = vrot.lane.b32.xlu0 %v260, 16
        %v356 = vpop.permute.xlu0 %355
        %v357 = vsel %vm350, %v354, %v356
        %v358 = vsel %vm350, %v356, %v354
        %v359 = vstv %s264
        %v360 = vmul.f32 %v359, %v352
        %v361 = vmul.f32 %v359, %v351
        %v362 = vstv %s273
        %v363 = vmul.f32 %v362, %v358
        %v364 = vmul.f32 %v362, %v357
        %v365 = vadd.f32 %v360, %v363
        %v366 = vadd.f32 %v361, %v364
        %s367 = scalar_lea.vmem [#allocation8], 1
        %v368 = vld [vmem:[%s367] ss:$8 sm:$0x3]
        %vm369 = vcmp.gt.f32.partialorder %v368, 0.5
        %v372 = vcombine.low %v365, %v366
        %v374 = vunpack.c.l.s4 1966171168
        %v375 = vunpack.c.0.s8 %v374
        %v376 = vlaneseq
        %v377 = vshrl.u32 %v376, 7
        %v378 = vsub.s32 %v375, %v377
        %v379 = vrot.slane %v372, %v378
        %v381 = vunpack.c.l.s4 1966171168
        %v382 = vunpack.c.0.s8 %v381
        %v383 = vlaneseq
        %v384 = vshrl.u32 %v383, 7
        %v385 = vsub.s32 %v382, %v384
        %v386 = vrot.slane %v379, %v385
        %v388 = vsel %vm369, %v386, 0.0
        %v390 = vlaneseq
        %v391 = vshrl.u32 %v390, 7
        %v392 = vsub.s32 0, %v391
        %v393 = vrot.slane %v388, %v392
        %v394 = vlaneseq
        %v395 = vshrl.u32 %v394, 7
        %v396 = vsub.s32 1, %v395
        %v397 = vrot.slane %v388, %v396
        %v400 = vadd.f32 %v344, %v393
        %v401 = vadd.f32 %v345, %v397
        %402 = vrot.lane.b32.xlu0 %v261, 15
        %v403 = vpop.permute.xlu0 %402
        %404 = vrot.lane.b32.xlu0 %v262, 15
        %v405 = vpop.permute.xlu0 %404
        %vm406 = vcmp.lt.s32.totalorder %v294, 15
        %v407 = vsel %vm406, %v403, %v405
        %v408 = vsel %vm406, %v405, %v403
        %409 = vrot.lane.b32.xlu0 %v253, 15
        %v410 = vpop.permute.xlu0 %409
        %411 = vrot.lane.b32.xlu0 %v260, 15
        %v412 = vpop.permute.xlu0 %411
        %v413 = vsel %vm406, %v410, %v412
        %v414 = vsel %vm406, %v412, %v410
        %v415 = vstv %s265
        %v416 = vmul.f32 %v415, %v408
        %v417 = vmul.f32 %v415, %v407
        %v418 = vstv %s274
        %v419 = vmul.f32 %v418, %v414
        %v420 = vmul.f32 %v418, %v413
        %v421 = vadd.f32 %v416, %v419
        %v422 = vadd.f32 %v417, %v420
        %s423 = scalar_lea.vmem [#allocation8], 2
        %v424 = vld [vmem:[%s423] ss:$8 sm:$0x3]
        %vm425 = vcmp.gt.f32.partialorder %v424, 0.5
        %v428 = vcombine.low %v421, %v422
        %v430 = vunpack.c.l.s4 1966171168
        %v431 = vunpack.c.0.s8 %v430
        %v432 = vlaneseq
        %v433 = vshrl.u32 %v432, 7
        %v434 = vsub.s32 %v431, %v433
        %v435 = vrot.slane %v428, %v434
        %v437 = vunpack.c.l.s4 1966171168
        %v438 = vunpack.c.0.s8 %v437
        %v439 = vlaneseq
        %v440 = vshrl.u32 %v439, 7
        %v441 = vsub.s32 %v438, %v440
        %v442 = vrot.slane %v435, %v441
        %v444 = vsel %vm425, %v442, 0.0
        %v446 = vlaneseq
        %v447 = vshrl.u32 %v446, 7
        %v448 = vsub.s32 0, %v447
        %v449 = vrot.slane %v444, %v448
        %v450 = vlaneseq
        %v451 = vshrl.u32 %v450, 7
        %v452 = vsub.s32 1, %v451
        %v453 = vrot.slane %v444, %v452
        %v456 = vadd.f32 %v400, %v449
        %v457 = vadd.f32 %v401, %v453
        %458 = vrot.lane.b32.xlu0 %v261, 1
        %v459 = vpop.permute.xlu0 %458
        %460 = vrot.lane.b32.xlu0 %v262, 1
        %v461 = vpop.permute.xlu0 %460
        %vm462 = vcmp.lt.s32.totalorder %v294, 1
        %v463 = vsel %vm462, %v459, %v461
        %v464 = vsel %vm462, %v461, %v459
        %465 = vrot.lane.b32.xlu0 %v253, 1
        %v466 = vpop.permute.xlu0 %465
        %467 = vrot.lane.b32.xlu0 %v260, 1
        %v468 = vpop.permute.xlu0 %467
        %v469 = vsel %vm462, %v466, %v468
        %v470 = vsel %vm462, %v468, %v466
        %v471 = vstv %s266
        %v472 = vmul.f32 %v471, %v464
        %v473 = vmul.f32 %v471, %v463
        %v474 = vstv %s275
        %v475 = vmul.f32 %v474, %v470
        %v476 = vmul.f32 %v474, %v469
        %v477 = vadd.f32 %v472, %v475
        %v478 = vadd.f32 %v473, %v476
        %s479 = scalar_lea.vmem [#allocation8], 3
        %v480 = vld [vmem:[%s479] ss:$8 sm:$0x3]
        %vm481 = vcmp.gt.f32.partialorder %v480, 0.5
        %v484 = vcombine.low %v477, %v478
        %v486 = vunpack.c.l.s4 1966171168
        %v487 = vunpack.c.0.s8 %v486
        %v488 = vlaneseq
        %v489 = vshrl.u32 %v488, 7
        %v490 = vsub.s32 %v487, %v489
        %v491 = vrot.slane %v484, %v490
        %v493 = vunpack.c.l.s4 1966171168
        %v494 = vunpack.c.0.s8 %v493
        %v495 = vlaneseq
        %v496 = vshrl.u32 %v495, 7
        %v497 = vsub.s32 %v494, %v496
        %v498 = vrot.slane %v491, %v497
        %v500 = vsel %vm481, %v498, 0.0
        %v502 = vlaneseq
        %v503 = vshrl.u32 %v502, 7
        %v504 = vsub.s32 0, %v503
        %v505 = vrot.slane %v500, %v504
        %v506 = vlaneseq
        %v507 = vshrl.u32 %v506, 7
        %v508 = vsub.s32 1, %v507
        %v509 = vrot.slane %v500, %v508
        %v512 = vadd.f32 %v456, %v505
        %v513 = vadd.f32 %v457, %v509
        %514 = vrot.lane.b32.xlu0 %v261, 127
        %v515 = vpop.permute.xlu0 %514
        %516 = vrot.lane.b32.xlu0 %v262, 127
        %v517 = vpop.permute.xlu0 %516
        %vm518 = vcmp.lt.s32.totalorder %v294, 127
        %v519 = vsel %vm518, %v515, %v517
        %v520 = vsel %vm518, %v517, %v515
        %521 = vrot.lane.b32.xlu0 %v253, 127
        %v522 = vpop.permute.xlu0 %521
        %523 = vrot.lane.b32.xlu0 %v260, 127
        %v524 = vpop.permute.xlu0 %523
        %v525 = vsel %vm518, %v522, %v524
        %v526 = vsel %vm518, %v524, %v522
        %v527 = vstv %s268
        %v528 = vmul.f32 %v527, %v519
        %v529 = vmul.f32 %v527, %v520
        %v530 = vstv %s277
        %v531 = vmul.f32 %v530, %v525
        %v532 = vmul.f32 %v530, %v526
        %v533 = vadd.f32 %v528, %v531
        %v534 = vadd.f32 %v529, %v532
        %s535 = scalar_lea.vmem [#allocation8], 4
        %v536 = vld [vmem:[%s535] ss:$8 sm:$0x3]
        %vm537 = vcmp.gt.f32.partialorder %v536, 0.5
        %v540 = vcombine.low %v533, %v534
        %v542 = vunpack.c.l.s4 1966171168
        %v543 = vunpack.c.0.s8 %v542
        %v544 = vlaneseq
        %v545 = vshrl.u32 %v544, 7
        %v546 = vsub.s32 %v543, %v545
        %v547 = vrot.slane %v540, %v546
        %v549 = vunpack.c.l.s4 1966171168
        %v550 = vunpack.c.0.s8 %v549
        %v551 = vlaneseq
        %v552 = vshrl.u32 %v551, 7
        %v553 = vsub.s32 %v550, %v552
        %v554 = vrot.slane %v547, %v553
        %v556 = vsel %vm537, %v554, 0.0
        %v558 = vlaneseq
        %v559 = vshrl.u32 %v558, 7
        %v560 = vsub.s32 0, %v559
        %v561 = vrot.slane %v556, %v560
        %v562 = vlaneseq
        %v563 = vshrl.u32 %v562, 7
        %v564 = vsub.s32 1, %v563
        %v565 = vrot.slane %v556, %v564
        %v568 = vadd.f32 %v512, %v561
        %v569 = vadd.f32 %v513, %v565
        %570 = vrot.lane.b32.xlu0 %v261, 113
        %v571 = vpop.permute.xlu0 %570
        %572 = vrot.lane.b32.xlu0 %v262, 113
        %v573 = vpop.permute.xlu0 %572
        %vm574 = vcmp.lt.s32.totalorder %v294, 113
        %v575 = vsel %vm574, %v571, %v573
        %v576 = vsel %vm574, %v573, %v571
        %577 = vrot.lane.b32.xlu0 %v253, 113
        %v578 = vpop.permute.xlu0 %577
        %579 = vrot.lane.b32.xlu0 %v260, 113
        %v580 = vpop.permute.xlu0 %579
        %v581 = vsel %vm574, %v578, %v580
        %v582 = vsel %vm574, %v580, %v578
        %v583 = vstv %s269
        %v584 = vmul.f32 %v583, %v575
        %v585 = vmul.f32 %v583, %v576
        %v586 = vstv %s278
        %v587 = vmul.f32 %v586, %v581
        %v588 = vmul.f32 %v586, %v582
        %v589 = vadd.f32 %v584, %v587
        %v590 = vadd.f32 %v585, %v588
        %s591 = scalar_lea.vmem [#allocation8], 5
        %v592 = vld [vmem:[%s591] ss:$8 sm:$0x3]
        %vm593 = vcmp.gt.f32.partialorder %v592, 0.5
        %v596 = vcombine.low %v589, %v590
        %v598 = vunpack.c.l.s4 1966171168
        %v599 = vunpack.c.0.s8 %v598
        %v600 = vlaneseq
        %v601 = vshrl.u32 %v600, 7
        %v602 = vsub.s32 %v599, %v601
        %v603 = vrot.slane %v596, %v602
        %v605 = vunpack.c.l.s4 1966171168
        %v606 = vunpack.c.0.s8 %v605
        %v607 = vlaneseq
        %v608 = vshrl.u32 %v607, 7
        %v609 = vsub.s32 %v606, %v608
        %v610 = vrot.slane %v603, %v609
        %v612 = vsel %vm593, %v610, 0.0
        %v614 = vlaneseq
        %v615 = vshrl.u32 %v614, 7
        %v616 = vsub.s32 0, %v615
        %v617 = vrot.slane %v612, %v616
        %v618 = vlaneseq
        %v619 = vshrl.u32 %v618, 7
        %v620 = vsub.s32 1, %v619
        %v621 = vrot.slane %v612, %v620
        %v624 = vadd.f32 %v568, %v617
        %v625 = vadd.f32 %v569, %v621
        %626 = vrot.lane.b32.xlu0 %v261, 112
        %v627 = vpop.permute.xlu0 %626
        %628 = vrot.lane.b32.xlu0 %v262, 112
        %v629 = vpop.permute.xlu0 %628
        %vm630 = vcmp.lt.s32.totalorder %v294, 112
        %v631 = vsel %vm630, %v627, %v629
        %v632 = vsel %vm630, %v629, %v627
        %633 = vrot.lane.b32.xlu0 %v253, 112
        %v634 = vpop.permute.xlu0 %633
        %635 = vrot.lane.b32.xlu0 %v260, 112
        %v636 = vpop.permute.xlu0 %635
        %v637 = vsel %vm630, %v634, %v636
        %v638 = vsel %vm630, %v636, %v634
        %v639 = vstv %s270
        %v640 = vmul.f32 %v639, %v631
        %v641 = vmul.f32 %v639, %v632
        %v642 = vstv %s279
        %v643 = vmul.f32 %v642, %v637
        %v644 = vmul.f32 %v642, %v638
        %v645 = vadd.f32 %v640, %v643
        %v646 = vadd.f32 %v641, %v644
        %s647 = scalar_lea.vmem [#allocation8], 6
        %v648 = vld [vmem:[%s647] ss:$8 sm:$0x3]
        %vm649 = vcmp.gt.f32.partialorder %v648, 0.5
        %v652 = vcombine.low %v645, %v646
        %v654 = vunpack.c.l.s4 1966171168
        %v655 = vunpack.c.0.s8 %v654
        %v656 = vlaneseq
        %v657 = vshrl.u32 %v656, 7
        %v658 = vsub.s32 %v655, %v657
        %v659 = vrot.slane %v652, %v658
        %v661 = vunpack.c.l.s4 1966171168
        %v662 = vunpack.c.0.s8 %v661
        %v663 = vlaneseq
        %v664 = vshrl.u32 %v663, 7
        %v665 = vsub.s32 %v662, %v664
        %v666 = vrot.slane %v659, %v665
        %v668 = vsel %vm649, %v666, 0.0
        %v670 = vlaneseq
        %v671 = vshrl.u32 %v670, 7
        %v672 = vsub.s32 0, %v671
        %v673 = vrot.slane %v668, %v672
        %v674 = vlaneseq
        %v675 = vshrl.u32 %v674, 7
        %v676 = vsub.s32 1, %v675
        %v677 = vrot.slane %v668, %v676
        %v680 = vadd.f32 %v624, %v673
        %v681 = vadd.f32 %v625, %v677
        %682 = vrot.lane.b32.xlu0 %v261, 111
        %v683 = vpop.permute.xlu0 %682
        %684 = vrot.lane.b32.xlu0 %v262, 111
        %v685 = vpop.permute.xlu0 %684
        %vm686 = vcmp.lt.s32.totalorder %v294, 111
        %v687 = vsel %vm686, %v683, %v685
        %v688 = vsel %vm686, %v685, %v683
        %689 = vrot.lane.b32.xlu0 %v253, 111
        %v690 = vpop.permute.xlu0 %689
        %691 = vrot.lane.b32.xlu0 %v260, 111
        %v692 = vpop.permute.xlu0 %691
        %v693 = vsel %vm686, %v690, %v692
        %v694 = vsel %vm686, %v692, %v690
        %v695 = vstv %s271
        %v696 = vmul.f32 %v695, %v687
        %v697 = vmul.f32 %v695, %v688
        %v698 = vstv %s280
        %v699 = vmul.f32 %v698, %v693
        %v700 = vmul.f32 %v698, %v694
        %v701 = vadd.f32 %v696, %v699
        %v702 = vadd.f32 %v697, %v700
        %s703 = scalar_lea.vmem [#allocation8], 7
        %v704 = vld [vmem:[%s703] ss:$8 sm:$0x3]
        %vm705 = vcmp.gt.f32.partialorder %v704, 0.5
        %v708 = vcombine.low %v701, %v702
        %v710 = vunpack.c.l.s4 1966171168
        %v711 = vunpack.c.0.s8 %v710
        %v712 = vlaneseq
        %v713 = vshrl.u32 %v712, 7
        %v714 = vsub.s32 %v711, %v713
        %v715 = vrot.slane %v708, %v714
        %v717 = vunpack.c.l.s4 1966171168
        %v718 = vunpack.c.0.s8 %v717
        %v719 = vlaneseq
        %v720 = vshrl.u32 %v719, 7
        %v721 = vsub.s32 %v718, %v720
        %v722 = vrot.slane %v715, %v721
        %v724 = vsel %vm705, %v722, 0.0
        %v726 = vlaneseq
        %v727 = vshrl.u32 %v726, 7
        %v728 = vsub.s32 0, %v727
        %v729 = vrot.slane %v724, %v728
        %v730 = vlaneseq
        %v731 = vshrl.u32 %v730, 7
        %v732 = vsub.s32 1, %v731
        %v733 = vrot.slane %v724, %v732
        %v736 = vadd.f32 %v680, %v729
        %v737 = vadd.f32 %v681, %v733
        %v738 = vxor.u32 %v736, 2147483648
        %v739 = vxor.u32 %v737, 2147483648
        %v740 = vmul.f32 %v738, 1.442695
        %v741 = vpow.pop %v740
        %v742 = vmul.f32 %v739, 1.442695
        %v743 = vpow.pop %v742
        %v744 = vadd.f32 %v741, 1.0
        %v745 = vadd.f32 %v743, 1.0
        %v746 = vrcp.pop %v744
        %v747 = vmul.f32 1.0, %v746
        %v748 = vrcp.pop %v745
        %v749 = vmul.f32 1.0, %v748
        %v752 = vcombine.low %v747, %v749
        %v754 = vunpack.c.l.s4 1966171168
        %v755 = vunpack.c.0.s8 %v754
        %v756 = vlaneseq
        %v757 = vshrl.u32 %v756, 7
        %v758 = vsub.s32 %v755, %v757
        %v759 = vrot.slane %v752, %v758
        %v761 = vunpack.c.l.s4 1966171168
        %v762 = vunpack.c.0.s8 %v761
        %v763 = vlaneseq
        %v764 = vshrl.u32 %v763, 7
        %v765 = vsub.s32 %v762, %v764
        %v766 = vrot.slane %v759, %v765
        %v768 = vlaneseq
        %vm769 = vcmp.ge.s32.totalorder %v768, 0
        %vm770 = vcmp.lt.s32.totalorder %v768, 256
        %vm771 = vmand %vm769, %vm770
        %772 = vst.msk [vmem:[%s227] sm:$0x3] %vm771, %v766
        %s773 = sand.u32 %s112, 1
        %s774 = scalar_lea.sflag [#allocation6], %s773
        %s775 = sand.u32 %s112, 1
        %s776 = smul.addr %s775, 2
        %s777 = scalar_lea.vmem [#allocation11], %s776
        // Predicated region
        $region45: #{tpu_custom_call.1} parent=31 // pred_check
          %p778 = pneg %p122
        $region46: #{tpu_custom_call.1} parent=31 // pred_check_branch
          %780 = sbr.rel (%p778) target = $region48
        $region47: #{tpu_custom_call.1} parent=31 // pred_region
          %s782 = ssub.s32 32, 32
          %783 = vsyncadd %s774, %s782
          %s784 = smul.addr %s26, 2
          %s785 = smul.addr %s784, 16
          %s786 = scalar_lea.hbm %s3, %s785
          %s788 = sshll.u32 %s777, 4
          %s789 = int_to_ptr.vmem [resolvable:$true] %s788
          %791 = dma.vmem_to_hbm [thread:$0]  %s789, 32, %s786, %s774
        $region48: #{tpu_custom_call.1} parent=31 // pred_fallthru
          _
      $region32: #{tpu_custom_call.1} parent=5 // pred_fallthru
        _
      %p792 = scmp.le.s32.totalorder 2, %s17
      // Predicated region
      $region49: #{tpu_custom_call.1} parent=5 // pred_check
        %p793 = pneg %p792
      $region50: #{tpu_custom_call.1} parent=5 // pred_check_branch
        %795 = sbr.rel (%p793) target = $region52
      $region51: #{tpu_custom_call.1} parent=5 // pred_region
        %s796 = ssub.s32 %s17, 2
        // Predicated region
        $region53: #{tpu_custom_call.1} parent=51 // pred_check
          %p797 = pneg %p128
        $region54: #{tpu_custom_call.1} parent=51 // pred_check_branch
          %799 = sbr.rel (%p797) target = $region56
        $region55: #{tpu_custom_call.1} parent=51 // pred_region
          %s800 = sand.u32 %s113, 1
          %s801 = scalar_lea.sflag [#allocation6], %s800
          %s802 = sand.u32 %s113, 1
          %s803 = smul.addr %s802, 2
          %s804 = scalar_lea.vmem [#allocation11], %s803
          %805 = dma.done %s801, 32
        $region56: #{tpu_custom_call.1} parent=51 // pred_fallthru
          _
      $region52: #{tpu_custom_call.1} parent=5 // pred_fallthru
        _
    $region6: #{tpu_custom_call.1} parent=1 // loop_footer
      %s21 = sadd.s32 1, %s17
    $region7: #{tpu_custom_call.1} parent=1 // loop_footer_branch
      %16 = sbr.rel target = $region3
    $region8: #{tpu_custom_call.1} parent=1 // loop_exit
      _
    %806 = vsyncpa [#allocation5], 1
    %s807 = scalar_lea.sflag [#allocation5], 1
    %808 = vsyncpa %s807, 1
    %809 = vsyncpa [#allocation10], 1
    %s810 = scalar_lea.sflag [#allocation10], 1
    %811 = vsyncpa %s810, 1
    %812 = vsyncpa [#allocation6], 1
    %s813 = scalar_lea.sflag [#allocation6], 1
    %814 = vsyncpa %s813, 1
    %815 = vsyncpa [#allocation7], 1
    %s816 = scalar_lea.sflag [#allocation7], 1
    %817 = vsyncpa %s816, 1

</llo_original>
